<compile_context>
chip_gen: v5e
topology: v5e:2x2
jax: 0.10.0
libtpu: 0.0.40
codegen_flags: <defaults>
</compile_context>

<pallas_src>
import functools

import jax
import jax.numpy as jnp
from jax.experimental import pallas as pl
from jax.experimental.pallas import tpu as pltpu

# Module hyper-parameters (BalancedAffinitiesLoss.__init__ defaults).
AFFINITIES_WEIGHT = 1.0
LSDS_WEIGHT = 1.0
NUM_AFFINITIES = 3
EPS = 1e-6

# Streamed per-channel sums (columns of the kernel output):
#   0: sum(m)   1: sum(m*t_pos)   2: sum(loss)   3: sum(loss*m)   4: sum(loss*m*t_pos)
# t_zero-weighted sums are recovered in the wrapper as
#   sum(m*t_zero)      = sum(m)      - sum(m*t_pos)
#   sum(loss*m*t_zero) = sum(loss*m) - sum(loss*m*t_pos)
# which is exact whenever target >= 0 (true for {0,1} affinities and [0,1] LSDs).
_N_SUMS = 5


# ------------------------------------------------------------------
# Pallas kernel: streaming per-channel sums for the balanced loss
# ------------------------------------------------------------------
def _make_balanced_sums_kernel(num_aff: int, C: int, tn: int, n_spatial: int,
                               tiles_per_split: int, needs_mask: bool):
    # BCE (exp/log on the EUP + extra VALU ops) is only needed for the first
    # `num_aff` channels; restrict it to the first sublane block (8 rows) when
    # the channel count spills past one block.
    split = 8 if (C > 8 and num_aff <= 8) else C
    has_bottom = split < C

    def lane_sum(x):
        return jnp.sum(x, axis=-1, keepdims=True)

    def accumulate(sums_ref, o, t, m, valid):
        if valid is not None:
            # Only the mask and the loss need zeroing on padded lanes:
            #  * (garbage > 0) is a clean 0/1, so t_pos / m*t_pos are safe via m == 0,
            #  * loss is select-masked (0 * NaN would otherwise poison the sums).
            m = jnp.where(valid, m, 0.0)
        t_pos = (t > 0.0).astype(jnp.float32)
        mp = m * t_pos

        diff = o - t
        mse = diff * diff

        # BCE only on the first sublane block (affinity channels live there).
        o_a = o[:split]
        t_a = t[:split]
        # Numerically-stable BCE-with-logits (matches torch BCEWithLogits):
        #   max(x, 0) - x*z + log(1 + exp(-|x|))
        bce = (jnp.maximum(o_a, 0.0) - o_a * t_a
               + jnp.log(1.0 + jnp.exp(-jnp.abs(o_a))))
        # Tiny (split, 1) channel selector -- NOT a full-width (C, tn) iota.
        row = jax.lax.broadcasted_iota(jnp.int32, (split, 1), 0)
        loss_a = jnp.where(row < num_aff, bce, mse[:split])
        if valid is not None:
            loss_a = jnp.where(valid[:split], loss_a, 0.0)

        # Per-step lane reduction straight into the tiny resident output block
        # (no full-width accumulator RMW, no separate finalize pass).
        sums_ref[:, 0:1] += lane_sum(m)
        sums_ref[:, 1:2] += lane_sum(mp)
        sums_ref[:split, 2:3] += lane_sum(loss_a)
        sums_ref[:split, 3:4] += lane_sum(loss_a * m[:split])
        sums_ref[:split, 4:5] += lane_sum(loss_a * mp[:split])
        if has_bottom:
            mse_b = mse[split:]
            if valid is not None:
                mse_b = jnp.where(valid[split:], mse_b, 0.0)
            sums_ref[split:, 2:3] += lane_sum(mse_b)
            sums_ref[split:, 3:4] += lane_sum(mse_b * m[split:])
            sums_ref[split:, 4:5] += lane_sum(mse_b * mp[split:])

    def kernel(o_ref, t_ref, m_ref, sums_ref):
        s = pl.program_id(1)   # lane-range split (core-parallel on multi-TC chips)
        n = pl.program_id(2)   # tile index inside the split (reduction axis)

        @pl.when(n == 0)
        def _init():
            sums_ref[...] = jnp.zeros_like(sums_ref)

        o = o_ref[...].astype(jnp.float32)   # (C, tn) logits
        t = t_ref[...].astype(jnp.float32)   # (C, tn) targets
        m = m_ref[...].astype(jnp.float32)   # (C, tn) mask (int8 -> f32 on the VPU)

        if not needs_mask:
            accumulate(sums_ref, o, t, m, None)
        else:
            gt = s * tiles_per_split + n        # global (unclamped) tile index
            tile_end = (gt + 1) * tn

            @pl.when(tile_end <= n_spatial)     # fully in-bounds tile: mask-free path
            def _fast():
                accumulate(sums_ref, o, t, m, None)

            @pl.when(tile_end > n_spatial)      # partial / fully-out-of-range tile
            def _masked():
                lane = jax.lax.broadcasted_iota(jnp.int32, o.shape, 1)
                valid = (gt * tn + lane) < n_spatial
                accumulate(sums_ref, o, t, m, valid)

    return kernel


def _balanced_sums(o3, t3, m3, num_aff: int, lane_tile: int,
                   num_core_splits: int, pipeline_buffers: int):
    """Per-channel streamed sums for arrays laid out as (B, C, N)."""
    B, C, n_spatial = o3.shape
    tn = min(int(lane_tile), pl.cdiv(n_spatial, 128) * 128)
    tn = max(128, (tn // 128) * 128)                 # lane tile, multiple of 128
    num_tiles = pl.cdiv(n_spatial, tn)

    # Explicit lane-range split so multi-TensorCore chips (v7x) get 2-way parallelism
    # even at batch 1; on single-TC chips it is just grid decomposition.
    n_split = max(1, min(int(num_core_splits), num_tiles))
    tiles_per_split = pl.cdiv(num_tiles, n_split)
    covered_tiles = n_split * tiles_per_split
    needs_mask = covered_tiles * tn != n_spatial
    needs_clamp = covered_tiles > num_tiles          # uneven split: clamp block index

    if needs_clamp:
        def data_index_map(b, s, n):
            return (b, 0, jnp.minimum(s * tiles_per_split + n, num_tiles - 1))
    else:
        def data_index_map(b, s, n):
            return (b, 0, s * tiles_per_split + n)

    def data_spec(buffers):
        # Optional pipeline-depth sweep knob (perf review): enable triple buffering
        # on the f32 inputs once compute ~ DMA.  Default (2) keeps standard behavior.
        if buffers is not None and buffers != 2 and hasattr(pl, "Buffered"):
            try:
                return pl.BlockSpec((None, C, tn), data_index_map,
                                    pipeline_mode=pl.Buffered(int(buffers)))
            except TypeError:
                pass
        return pl.BlockSpec((None, C, tn), data_index_map)

    kernel = _make_balanced_sums_kernel(num_aff, C, tn, n_spatial,
                                        tiles_per_split, needs_mask)

    bytes_accessed = (B * C * n_spatial *
                      (o3.dtype.itemsize + t3.dtype.itemsize + m3.dtype.itemsize)
                      + B * n_split * C * _N_SUMS * 4)
    cost = pl.CostEstimate(
        flops=int(14 * B * C * n_spatial),
        transcendentals=int(2 * B * num_aff * n_spatial),
        bytes_accessed=int(bytes_accessed),
    )

    sums = pl.pallas_call(
        kernel,
        out_shape=jax.ShapeDtypeStruct((B, n_split, C, _N_SUMS), jnp.float32),
        grid_spec=pltpu.PrefetchScalarGridSpec(
            num_scalar_prefetch=0,
            grid=(B, n_split, tiles_per_split),
            in_specs=[data_spec(pipeline_buffers),   # logits  (f32)
                      data_spec(pipeline_buffers),   # targets (f32)
                      data_spec(None)],              # mask    (int8)
            out_specs=pl.BlockSpec((None, None, C, _N_SUMS),
                                   lambda b, s, n: (b, s, 0, 0)),
        ),
        compiler_params=pltpu.CompilerParams(
            dimension_semantics=("parallel", "parallel", "arbitrary"),
            vmem_limit_bytes=32 * 1024 * 1024,
        ),
        cost_estimate=cost,
    )(o3, t3, m3)

    return jnp.sum(sums, axis=(0, 1))   # (C, 5): totals over batch + splits + spatial


# ------------------------------------------------------------------
# Wrapper reproducing BalancedAffinitiesLoss.forward
# ------------------------------------------------------------------
def balanced_affinities_loss(output, target, mask,
                             affinities_weight=AFFINITIES_WEIGHT,
                             lsds_weight=LSDS_WEIGHT,
                             num_affinities=NUM_AFFINITIES,
                             eps=EPS,
                             lane_tile=32768,
                             num_core_splits=2,
                             pipeline_buffers=2):
    B, C = output.shape[0], output.shape[1]
    n_spatial = 1
    for s in output.shape[2:]:
        n_spatial *= s
    Ca = num_affinities

    # Free reshapes (contiguous trailing dims merged) -- no transposes, no HBM copies.
    o3 = output.reshape(B, C, n_spatial)
    t3 = target.reshape(B, C, n_spatial)
    m3 = mask.reshape(B, C, n_spatial)

    S = _balanced_sums(o3, t3, m3, Ca, lane_tile, num_core_splits, pipeline_buffers)
    s_m, s_mp, s_l, s_lm, s_lp = (S[:, i] for i in range(_N_SUMS))

    # NOTE: assumes target >= 0 (so (t == 0) == 1 - (t > 0)); true for {0,1}
    # affinities and [0,1] LSD targets produced by the fly_organelles pipeline.
    s_mz = s_m - s_mp        # sum(m * t_zero)
    s_lz = s_lm - s_lp       # sum(loss * m * t_zero)

    # Class-balance weights, applied algebraically to the streamed sums:
    #   weight = m * (t_pos * pos_w + t_zero * neg_w)     (per channel)
    pos_w = (s_m - s_mp) / (s_m + eps)    # neg / (total_valid + eps)
    neg_w = s_mp / (s_m + eps)            # pos / (total_valid + eps)
    wsum_c = pos_w * s_mp + neg_w * s_mz        # sum(weight)        per channel
    wloss_c = pos_w * s_lp + neg_w * s_lz       # sum(loss * weight) per channel

    def group_loss(c0, c1):
        Cg = c1 - c0
        denom = jnp.sum(wsum_c[c0:c1])
        n_el = B * Cg * n_spatial
        # TODO(synk): PyTorch branches on denom.detach().item() in Python; here the
        # data-dependent branch is expressed with jnp.where (same numerics).
        return jnp.where(denom < eps,
                         jnp.sum(s_l[c0:c1]) / n_el,          # fallback: plain mean
                         jnp.sum(wloss_c[c0:c1]) / (denom + eps) / Cg)

    return (affinities_weight * group_loss(0, Ca)
            + lsds_weight * group_loss(Ca, C))


# ------------------------------------------------------------------
# Pure-JAX reference (direct transcription of the PyTorch forward)
# ------------------------------------------------------------------
def reference_loss(output, target, mask):
    def group(o, t, m, kind):
        bs, Cc = o.shape[:2]
        mf = m.astype(jnp.float32).reshape(bs, Cc, -1)
        tf = (t > 0.0).astype(jnp.float32).reshape(bs, Cc, -1)
        total = mf.sum(axis=(0, 2))
        pos = (tf * mf).sum(axis=(0, 2))
        neg = total - pos
        pw = (neg / (total + EPS)).reshape((1, Cc) + (1,) * (o.ndim - 2))
        nw = (pos / (total + EPS)).reshape((1, Cc) + (1,) * (o.ndim - 2))
        w = m.astype(jnp.float32) * (
            (t > 0.0).astype(jnp.float32) * pw + (t == 0.0).astype(jnp.float32) * nw
        )
        if kind == "bce":
            el = jnp.maximum(o, 0.0) - o * t + jnp.log(1.0 + jnp.exp(-jnp.abs(o)))
        else:
            el = (o - t) ** 2
        denom = w.sum()
        return jnp.where(denom < EPS, el.mean(), (el * w).sum() / (denom + EPS) / Cc)

    la = group(output[:, :NUM_AFFINITIES], target[:, :NUM_AFFINITIES],
               mask[:, :NUM_AFFINITIES], "bce")
    ll = group(output[:, NUM_AFFINITIES:], target[:, NUM_AFFINITIES:],
               mask[:, NUM_AFFINITIES:], "mse")
    return AFFINITIES_WEIGHT * la + LSDS_WEIGHT * ll


if __name__ == "__main__":
    def make_inputs(key, B, C_aff, C_lsds, spatial):
        k1, k2, k3, k4 = jax.random.split(key, 4)
        C = C_aff + C_lsds
        shape = (B, C) + spatial
        out = jax.random.normal(k1, shape, dtype=jnp.float32)
        tgt_aff = (jax.random.uniform(k2, (B, C_aff) + spatial) > 0.5).astype(jnp.float32)
        tgt_lsds = jax.random.uniform(k3, (B, C_lsds) + spatial, dtype=jnp.float32)
        tgt = jnp.concatenate([tgt_aff, tgt_lsds], axis=1)
        # Mask streamed as int8: the kernel casts to f32 on-chip (cuts HBM bytes).
        msk = (jax.random.uniform(k4, shape) > 0.3).astype(jnp.int8)
        return out, tgt, msk

    # Config 1: module-like small shape, single lane tile (fast path).
    out1, tgt1, msk1 = make_inputs(jax.random.PRNGKey(0), 2, NUM_AFFINITIES, 10, (8, 8, 8))
    loss_fn = jax.jit(balanced_affinities_loss)
    loss1 = jax.block_until_ready(loss_fn(out1, tgt1, msk1))
    ref1 = jax.block_until_ready(reference_loss(out1, tgt1, msk1))
    assert jnp.isfinite(loss1), "kernel produced non-finite loss"
    assert jnp.allclose(loss1, ref1, rtol=1e-4, atol=1e-5), (loss1, ref1)

    # Config 2: small lane tile to exercise multi-tile streaming, the 2-way core
    # split, the clamped out-of-range step and partial-tile lane masking.
    out2, tgt2, msk2 = make_inputs(jax.random.PRNGKey(1), 1, NUM_AFFINITIES, 10, (8, 8, 10))
    loss_fn2 = jax.jit(functools.partial(balanced_affinities_loss, lane_tile=256))
    loss2 = jax.block_until_ready(loss_fn2(out2, tgt2, msk2))
    ref2 = jax.block_until_ready(reference_loss(out2, tgt2, msk2))
    assert jnp.isfinite(loss2), "kernel produced non-finite loss (tiled config)"
    assert jnp.allclose(loss2, ref2, rtol=1e-4, atol=1e-5), (loss2, ref2)

    print("KERNEL_OK")
</pallas_src>

<mosaic_0001>
module attributes {stable_mosaic.version = 11 : i64} {
  func.func @kernel(%arg0: i32, %arg1: i32, %arg2: i32, %arg3: memref<1x13x512xf32, #tpu.memory_space<vmem>>, %arg4: memref<1x13x512xf32, #tpu.memory_space<vmem>>, %arg5: memref<1x13x512xi8, #tpu.memory_space<vmem>>, %arg6: memref<1x1x13x5xf32, #tpu.memory_space<vmem>>) attributes {dimension_semantics = [#tpu.dimension_semantics<parallel>, #tpu.dimension_semantics<parallel>, #tpu.dimension_semantics<arbitrary>], iteration_bounds = array<i64: 2, 1, 1>, scalar_prefetch = 0 : i64, scratch_operands = 0 : i64, tpu.core_type = #tpu.core_type<tc>, window_params = [{transform_indices = @transform_0, window_bounds = array<i64: 1, 13, 512>}, {transform_indices = @transform_1, window_bounds = array<i64: 1, 13, 512>}, {transform_indices = @transform_2, window_bounds = array<i64: 1, 13, 512>}, {transform_indices = @transform_3, window_bounds = array<i64: 1, 1, 13, 5>}]} {
    %c0_i32 = arith.constant 0 : i32
    %0 = arith.cmpi eq, %arg2, %c0_i32 : i32
    %1 = arith.extui %0 : i1 to i32
    %c0_i32_0 = arith.constant 0 : i32
    %2 = arith.cmpi ne, %1, %c0_i32_0 : i32
    scf.if %2 {
      %cst_79 = arith.constant 0.000000e+00 : f32
      %111 = vector.broadcast %cst_79 : f32 to vector<13x5xf32>
      %c0_80 = arith.constant 0 : index
      %c0_81 = arith.constant 0 : index
      %c0_82 = arith.constant 0 : index
      %c0_83 = arith.constant 0 : index
      %112 = vector.load %arg6[%c0_80, %c0_81, %c0_82, %c0_83] : memref<1x1x13x5xf32, #tpu.memory_space<vmem>>, vector<1x1x13x5xf32>
      %113 = vector.shape_cast %112 : vector<1x1x13x5xf32> to vector<13x5xf32>
      %114 = vector.shape_cast %111 : vector<13x5xf32> to vector<1x1x13x5xf32>
      tpu.vector_store %arg6[%c0_80, %c0_81, %c0_82, %c0_83], %114 {strides = array<i32>} : memref<1x1x13x5xf32, #tpu.memory_space<vmem>>, vector<1x1x13x5xf32>,
    } else {
    }
    %c0 = arith.constant 0 : index
    %c0_1 = arith.constant 0 : index
    %c0_2 = arith.constant 0 : index
    %3 = vector.load %arg3[%c0, %c0_1, %c0_2] : memref<1x13x512xf32, #tpu.memory_space<vmem>>, vector<1x13x512xf32>
    %4 = vector.shape_cast %3 : vector<1x13x512xf32> to vector<13x512xf32>
    %c0_3 = arith.constant 0 : index
    %c0_4 = arith.constant 0 : index
    %c0_5 = arith.constant 0 : index
    %5 = vector.load %arg4[%c0_3, %c0_4, %c0_5] : memref<1x13x512xf32, #tpu.memory_space<vmem>>, vector<1x13x512xf32>
    %6 = vector.shape_cast %5 : vector<1x13x512xf32> to vector<13x512xf32>
    %c0_6 = arith.constant 0 : index
    %c0_7 = arith.constant 0 : index
    %c0_8 = arith.constant 0 : index
    %7 = vector.load %arg5[%c0_6, %c0_7, %c0_8] : memref<1x13x512xi8, #tpu.memory_space<vmem>>, vector<1x13x512xi8>
    %8 = vector.shape_cast %7 : vector<1x13x512xi8> to vector<13x512xi8>
    %9 = arith.sitofp %8 : vector<13x512xi8> to vector<13x512xf32>
    %cst = arith.constant 0.000000e+00 : f32
    %10 = vector.broadcast %cst : f32 to vector<13x512xf32>
    %11 = arith.cmpf ogt, %6, %10 : vector<13x512xf32>
    %12 = arith.extui %11 : vector<13x512xi1> to vector<13x512xi32>
    %13 = arith.sitofp %12 : vector<13x512xi32> to vector<13x512xf32>
    %14 = arith.mulf %9, %13 : vector<13x512xf32>
    %15 = arith.subf %4, %6 : vector<13x512xf32>
    %16 = arith.mulf %15, %15 : vector<13x512xf32>
    %17 = vector.extract_strided_slice %4 {offsets = [0, 0], sizes = [8, 512], strides = [1, 1]} : vector<13x512xf32> to vector<8x512xf32>
    %18 = vector.extract_strided_slice %6 {offsets = [0, 0], sizes = [8, 512], strides = [1, 1]} : vector<13x512xf32> to vector<8x512xf32>
    %cst_9 = arith.constant 0.000000e+00 : f32
    %19 = vector.broadcast %cst_9 : f32 to vector<8x512xf32>
    %20 = arith.maximumf %17, %19 : vector<8x512xf32>
    %21 = arith.mulf %17, %18 : vector<8x512xf32>
    %22 = arith.subf %20, %21 : vector<8x512xf32>
    %23 = math.absf %17 : vector<8x512xf32>
    %cst_10 = arith.constant 0.000000e+00 : f32
    %24 = vector.broadcast %cst_10 : f32 to vector<8x512xf32>
    %25 = arith.subf %24, %23 : vector<8x512xf32>
    %26 = math.exp %25 : vector<8x512xf32>
    %cst_11 = arith.constant 1.000000e+00 : f32
    %27 = vector.broadcast %cst_11 : f32 to vector<8x512xf32>
    %28 = arith.addf %27, %26 : vector<8x512xf32>
    %29 = math.log %28 : vector<8x512xf32>
    %30 = arith.addf %22, %29 : vector<8x512xf32>
    %31 = tpu.iota {dimensions = array<i32: 0>} : vector<8x1xi32>
    %c3_i32 = arith.constant 3 : i32
    %32 = vector.broadcast %c3_i32 : i32 to vector<8x1xi32>
    %33 = arith.cmpi slt, %31, %32 : vector<8x1xi32>
    %34 = vector.extract_strided_slice %16 {offsets = [0, 0], sizes = [8, 512], strides = [1, 1]} : vector<13x512xf32> to vector<8x512xf32>
    %35 = vector.shape_cast %33 : vector<8x1xi1> to vector<8x1xi1>
    %36 = vector.broadcast %35 : vector<8x1xi1> to vector<8x512xi1>
    %37 = arith.select %36, %30, %34 : vector<8x512xi1>, vector<8x512xf32>
    %c0_12 = arith.constant 0 : index
    %c0_13 = arith.constant 0 : index
    %c0_14 = arith.constant 0 : index
    %c0_15 = arith.constant 0 : index
    %38 = vector.load %arg6[%c0_12, %c0_13, %c0_14, %c0_15] : memref<1x1x13x5xf32, #tpu.memory_space<vmem>>, vector<1x1x13x1xf32>
    %39 = vector.shape_cast %38 : vector<1x1x13x1xf32> to vector<13x1xf32>
    %cst_16 = arith.constant dense<0.000000e+00> : vector<13xf32>
    %40 = vector.multi_reduction <add>, %9, %cst_16 [1] : vector<13x512xf32> to vector<13xf32>
    %41 = vector.shape_cast %40 : vector<13xf32> to vector<13x1xf32>
    %42 = arith.addf %39, %41 : vector<13x1xf32>
    %c0_17 = arith.constant 0 : index
    %c0_18 = arith.constant 0 : index
    %c0_19 = arith.constant 0 : index
    %c0_20 = arith.constant 0 : index
    %43 = vector.load %arg6[%c0_17, %c0_18, %c0_19, %c0_20] : memref<1x1x13x5xf32, #tpu.memory_space<vmem>>, vector<1x1x13x1xf32>
    %44 = vector.shape_cast %43 : vector<1x1x13x1xf32> to vector<13x1xf32>
    %45 = vector.shape_cast %42 : vector<13x1xf32> to vector<1x1x13x1xf32>
    tpu.vector_store %arg6[%c0_17, %c0_18, %c0_19, %c0_20], %45 {strides = array<i32>} : memref<1x1x13x5xf32, #tpu.memory_space<vmem>>, vector<1x1x13x1xf32>,
    %c0_21 = arith.constant 0 : index
    %c0_22 = arith.constant 0 : index
    %c0_23 = arith.constant 0 : index
    %c1 = arith.constant 1 : index
    %46 = vector.load %arg6[%c0_21, %c0_22, %c0_23, %c1] : memref<1x1x13x5xf32, #tpu.memory_space<vmem>>, vector<1x1x13x1xf32>
    %47 = vector.shape_cast %46 : vector<1x1x13x1xf32> to vector<13x1xf32>
    %cst_24 = arith.constant dense<0.000000e+00> : vector<13xf32>
    %48 = vector.multi_reduction <add>, %14, %cst_24 [1] : vector<13x512xf32> to vector<13xf32>
    %49 = vector.shape_cast %48 : vector<13xf32> to vector<13x1xf32>
    %50 = arith.addf %47, %49 : vector<13x1xf32>
    %c0_25 = arith.constant 0 : index
    %c0_26 = arith.constant 0 : index
    %c0_27 = arith.constant 0 : index
    %c1_28 = arith.constant 1 : index
    %51 = vector.load %arg6[%c0_25, %c0_26, %c0_27, %c1_28] : memref<1x1x13x5xf32, #tpu.memory_space<vmem>>, vector<1x1x13x1xf32>
    %52 = vector.shape_cast %51 : vector<1x1x13x1xf32> to vector<13x1xf32>
    %53 = vector.shape_cast %50 : vector<13x1xf32> to vector<1x1x13x1xf32>
    tpu.vector_store %arg6[%c0_25, %c0_26, %c0_27, %c1_28], %53 {strides = array<i32>} : memref<1x1x13x5xf32, #tpu.memory_space<vmem>>, vector<1x1x13x1xf32>,
    %c0_29 = arith.constant 0 : index
    %c0_30 = arith.constant 0 : index
    %c0_31 = arith.constant 0 : index
    %c2 = arith.constant 2 : index
    %54 = vector.load %arg6[%c0_29, %c0_30, %c0_31, %c2] : memref<1x1x13x5xf32, #tpu.memory_space<vmem>>, vector<1x1x8x1xf32>
    %55 = vector.shape_cast %54 : vector<1x1x8x1xf32> to vector<8x1xf32>
    %cst_32 = arith.constant dense<0.000000e+00> : vector<8xf32>
    %56 = vector.multi_reduction <add>, %37, %cst_32 [1] : vector<8x512xf32> to vector<8xf32>
    %57 = vector.shape_cast %56 : vector<8xf32> to vector<8x1xf32>
    %58 = arith.addf %55, %57 : vector<8x1xf32>
    %c0_33 = arith.constant 0 : index
    %c0_34 = arith.constant 0 : index
    %c0_35 = arith.constant 0 : index
    %c2_36 = arith.constant 2 : index
    %59 = vector.load %arg6[%c0_33, %c0_34, %c0_35, %c2_36] : memref<1x1x13x5xf32, #tpu.memory_space<vmem>>, vector<1x1x8x1xf32>
    %60 = vector.shape_cast %59 : vector<1x1x8x1xf32> to vector<8x1xf32>
    %61 = vector.shape_cast %58 : vector<8x1xf32> to vector<1x1x8x1xf32>
    tpu.vector_store %arg6[%c0_33, %c0_34, %c0_35, %c2_36], %61 {strides = array<i32>} : memref<1x1x13x5xf32, #tpu.memory_space<vmem>>, vector<1x1x8x1xf32>,
    %c0_37 = arith.constant 0 : index
    %c0_38 = arith.constant 0 : index
    %c0_39 = arith.constant 0 : index
    %c3 = arith.constant 3 : index
    %62 = vector.load %arg6[%c0_37, %c0_38, %c0_39, %c3] : memref<1x1x13x5xf32, #tpu.memory_space<vmem>>, vector<1x1x8x1xf32>
    %63 = vector.shape_cast %62 : vector<1x1x8x1xf32> to vector<8x1xf32>
    %64 = vector.extract_strided_slice %9 {offsets = [0, 0], sizes = [8, 512], strides = [1, 1]} : vector<13x512xf32> to vector<8x512xf32>
    %65 = arith.mulf %37, %64 : vector<8x512xf32>
    %cst_40 = arith.constant dense<0.000000e+00> : vector<8xf32>
    %66 = vector.multi_reduction <add>, %65, %cst_40 [1] : vector<8x512xf32> to vector<8xf32>
    %67 = vector.shape_cast %66 : vector<8xf32> to vector<8x1xf32>
    %68 = arith.addf %63, %67 : vector<8x1xf32>
    %c0_41 = arith.constant 0 : index
    %c0_42 = arith.constant 0 : index
    %c0_43 = arith.constant 0 : index
    %c3_44 = arith.constant 3 : index
    %69 = vector.load %arg6[%c0_41, %c0_42, %c0_43, %c3_44] : memref<1x1x13x5xf32, #tpu.memory_space<vmem>>, vector<1x1x8x1xf32>
    %70 = vector.shape_cast %69 : vector<1x1x8x1xf32> to vector<8x1xf32>
    %71 = vector.shape_cast %68 : vector<8x1xf32> to vector<1x1x8x1xf32>
    tpu.vector_store %arg6[%c0_41, %c0_42, %c0_43, %c3_44], %71 {strides = array<i32>} : memref<1x1x13x5xf32, #tpu.memory_space<vmem>>, vector<1x1x8x1xf32>,
    %c0_45 = arith.constant 0 : index
    %c0_46 = arith.constant 0 : index
    %c0_47 = arith.constant 0 : index
    %c4 = arith.constant 4 : index
    %72 = vector.load %arg6[%c0_45, %c0_46, %c0_47, %c4] : memref<1x1x13x5xf32, #tpu.memory_space<vmem>>, vector<1x1x8x1xf32>
    %73 = vector.shape_cast %72 : vector<1x1x8x1xf32> to vector<8x1xf32>
    %74 = vector.extract_strided_slice %14 {offsets = [0, 0], sizes = [8, 512], strides = [1, 1]} : vector<13x512xf32> to vector<8x512xf32>
    %75 = arith.mulf %37, %74 : vector<8x512xf32>
    %cst_48 = arith.constant dense<0.000000e+00> : vector<8xf32>
    %76 = vector.multi_reduction <add>, %75, %cst_48 [1] : vector<8x512xf32> to vector<8xf32>
    %77 = vector.shape_cast %76 : vector<8xf32> to vector<8x1xf32>
    %78 = arith.addf %73, %77 : vector<8x1xf32>
    %c0_49 = arith.constant 0 : index
    %c0_50 = arith.constant 0 : index
    %c0_51 = arith.constant 0 : index
    %c4_52 = arith.constant 4 : index
    %79 = vector.load %arg6[%c0_49, %c0_50, %c0_51, %c4_52] : memref<1x1x13x5xf32, #tpu.memory_space<vmem>>, vector<1x1x8x1xf32>
    %80 = vector.shape_cast %79 : vector<1x1x8x1xf32> to vector<8x1xf32>
    %81 = vector.shape_cast %78 : vector<8x1xf32> to vector<1x1x8x1xf32>
    tpu.vector_store %arg6[%c0_49, %c0_50, %c0_51, %c4_52], %81 {strides = array<i32>} : memref<1x1x13x5xf32, #tpu.memory_space<vmem>>, vector<1x1x8x1xf32>,
    %82 = vector.extract_strided_slice %16 {offsets = [8, 0], sizes = [5, 512], strides = [1, 1]} : vector<13x512xf32> to vector<5x512xf32>
    %c0_53 = arith.constant 0 : index
    %c0_54 = arith.constant 0 : index
    %c8 = arith.constant 8 : index
    %c2_55 = arith.constant 2 : index
    %83 = vector.load %arg6[%c0_53, %c0_54, %c8, %c2_55] : memref<1x1x13x5xf32, #tpu.memory_space<vmem>>, vector<1x1x5x1xf32>
    %84 = vector.shape_cast %83 : vector<1x1x5x1xf32> to vector<5x1xf32>
    %cst_56 = arith.constant dense<0.000000e+00> : vector<5xf32>
    %85 = vector.multi_reduction <add>, %82, %cst_56 [1] : vector<5x512xf32> to vector<5xf32>
    %86 = vector.shape_cast %85 : vector<5xf32> to vector<5x1xf32>
    %87 = arith.addf %84, %86 : vector<5x1xf32>
    %c0_57 = arith.constant 0 : index
    %c0_58 = arith.constant 0 : index
    %c8_59 = arith.constant 8 : index
    %c2_60 = arith.constant 2 : index
    %88 = vector.load %arg6[%c0_57, %c0_58, %c8_59, %c2_60] : memref<1x1x13x5xf32, #tpu.memory_space<vmem>>, vector<1x1x5x1xf32>
    %89 = vector.shape_cast %88 : vector<1x1x5x1xf32> to vector<5x1xf32>
    %90 = vector.shape_cast %87 : vector<5x1xf32> to vector<1x1x5x1xf32>
    tpu.vector_store %arg6[%c0_57, %c0_58, %c8_59, %c2_60], %90 {strides = array<i32>} : memref<1x1x13x5xf32, #tpu.memory_space<vmem>>, vector<1x1x5x1xf32>,
    %c0_61 = arith.constant 0 : index
    %c0_62 = arith.constant 0 : index
    %c8_63 = arith.constant 8 : index
    %c3_64 = arith.constant 3 : index
    %91 = vector.load %arg6[%c0_61, %c0_62, %c8_63, %c3_64] : memref<1x1x13x5xf32, #tpu.memory_space<vmem>>, vector<1x1x5x1xf32>
    %92 = vector.shape_cast %91 : vector<1x1x5x1xf32> to vector<5x1xf32>
    %93 = vector.extract_strided_slice %9 {offsets = [8, 0], sizes = [5, 512], strides = [1, 1]} : vector<13x512xf32> to vector<5x512xf32>
    %94 = arith.mulf %82, %93 : vector<5x512xf32>
    %cst_65 = arith.constant dense<0.000000e+00> : vector<5xf32>
    %95 = vector.multi_reduction <add>, %94, %cst_65 [1] : vector<5x512xf32> to vector<5xf32>
    %96 = vector.shape_cast %95 : vector<5xf32> to vector<5x1xf32>
    %97 = arith.addf %92, %96 : vector<5x1xf32>
    %c0_66 = arith.constant 0 : index
    %c0_67 = arith.constant 0 : index
    %c8_68 = arith.constant 8 : index
    %c3_69 = arith.constant 3 : index
    %98 = vector.load %arg6[%c0_66, %c0_67, %c8_68, %c3_69] : memref<1x1x13x5xf32, #tpu.memory_space<vmem>>, vector<1x1x5x1xf32>
    %99 = vector.shape_cast %98 : vector<1x1x5x1xf32> to vector<5x1xf32>
    %100 = vector.shape_cast %97 : vector<5x1xf32> to vector<1x1x5x1xf32>
    tpu.vector_store %arg6[%c0_66, %c0_67, %c8_68, %c3_69], %100 {strides = array<i32>} : memref<1x1x13x5xf32, #tpu.memory_space<vmem>>, vector<1x1x5x1xf32>,
    %c0_70 = arith.constant 0 : index
    %c0_71 = arith.constant 0 : index
    %c8_72 = arith.constant 8 : index
    %c4_73 = arith.constant 4 : index
    %101 = vector.load %arg6[%c0_70, %c0_71, %c8_72, %c4_73] : memref<1x1x13x5xf32, #tpu.memory_space<vmem>>, vector<1x1x5x1xf32>
    %102 = vector.shape_cast %101 : vector<1x1x5x1xf32> to vector<5x1xf32>
    %103 = vector.extract_strided_slice %14 {offsets = [8, 0], sizes = [5, 512], strides = [1, 1]} : vector<13x512xf32> to vector<5x512xf32>
    %104 = arith.mulf %82, %103 : vector<5x512xf32>
    %cst_74 = arith.constant dense<0.000000e+00> : vector<5xf32>
    %105 = vector.multi_reduction <add>, %104, %cst_74 [1] : vector<5x512xf32> to vector<5xf32>
    %106 = vector.shape_cast %105 : vector<5xf32> to vector<5x1xf32>
    %107 = arith.addf %102, %106 : vector<5x1xf32>
    %c0_75 = arith.constant 0 : index
    %c0_76 = arith.constant 0 : index
    %c8_77 = arith.constant 8 : index
    %c4_78 = arith.constant 4 : index
    %108 = vector.load %arg6[%c0_75, %c0_76, %c8_77, %c4_78] : memref<1x1x13x5xf32, #tpu.memory_space<vmem>>, vector<1x1x5x1xf32>
    %109 = vector.shape_cast %108 : vector<1x1x5x1xf32> to vector<5x1xf32>
    %110 = vector.shape_cast %107 : vector<5x1xf32> to vector<1x1x5x1xf32>
    tpu.vector_store %arg6[%c0_75, %c0_76, %c8_77, %c4_78], %110 {strides = array<i32>} : memref<1x1x13x5xf32, #tpu.memory_space<vmem>>, vector<1x1x5x1xf32>,
    return
  }
  func.func @transform_0(%arg0: i32, %arg1: i32, %arg2: i32) -> (i32, i32, i32) {
    %c1_i32 = arith.constant 1 : i32
    %0 = arith.muli %arg1, %c1_i32 : i32
    %1 = arith.addi %0, %arg2 : i32
    %c0_i32 = arith.constant 0 : i32
    %c0_i32_0 = arith.constant 0 : i32
    return %arg0, %c0_i32, %1 : i32, i32, i32
  }
  func.func @transform_1(%arg0: i32, %arg1: i32, %arg2: i32) -> (i32, i32, i32) {
    %c1_i32 = arith.constant 1 : i32
    %0 = arith.muli %arg1, %c1_i32 : i32
    %1 = arith.addi %0, %arg2 : i32
    %c0_i32 = arith.constant 0 : i32
    %c0_i32_0 = arith.constant 0 : i32
    return %arg0, %c0_i32, %1 : i32, i32, i32
  }
  func.func @transform_2(%arg0: i32, %arg1: i32, %arg2: i32) -> (i32, i32, i32) {
    %c1_i32 = arith.constant 1 : i32
    %0 = arith.muli %arg1, %c1_i32 : i32
    %1 = arith.addi %0, %arg2 : i32
    %c0_i32 = arith.constant 0 : i32
    %c0_i32_0 = arith.constant 0 : i32
    return %arg0, %c0_i32, %1 : i32, i32, i32
  }
  func.func @transform_3(%arg0: i32, %arg1: i32, %arg2: i32) -> (i32, i32, i32, i32) {
    %c0_i32 = arith.constant 0 : i32
    %c0_i32_0 = arith.constant 0 : i32
    %c0_i32_1 = arith.constant 0 : i32
    return %arg0, %arg1, %c0_i32, %c0_i32_0 : i32, i32, i32, i32
  }
}

</mosaic_0001>

<llo_original>
// kernel: balanced_affinities_loss.1
$region0: #{balanced_affinities_loss.1}
  #allocation0 [shape = 'u32[]', space=smem, size = 0x4, offset = 0x4, fixed_abs, tag = 'smem constant byte address 0x4 - core index']
  #allocation1 [shape = 'u32[72,128]{1,0:T(1,128)}', space=vmem, size = 0x9000, scoped, tag = 'internal scratch']
  %s0 = inlined_call_operand.vmem [shape: f32[2,13,512], index: 0, kind: input, shape index: {}]
  %s1 = inlined_call_operand.vmem [shape: f32[2,13,512], index: 1, kind: input, shape index: {}]
  %s2 = inlined_call_operand.vmem [shape: s8[2,13,512], index: 2, kind: input, shape index: {}]
  %s3 = inlined_call_operand.vmem [shape: f32[2,1,13,5], index: 3, kind: output, shape index: {}]
  %s4 = sld [smem:[#allocation0]]
  $region49: #{balanced_affinities_loss.1} parent=0
    _
  %s6 = ssub.s32 1, %s4
  %s7 = scalar_select 0, %s6, %s4
  loop: start=0, step=1, limit=4
  $region2: #{balanced_affinities_loss.1} parent=0 // loop_pre_header
    _
  $region3: #{balanced_affinities_loss.1} parent=0 // loop_header
    %s9 = sphi 0, %s13
    %p10 = scmp.ge.s32.totalorder %s9, 4
    %s16 = sphi 0, %s35
    %s17 = sphi 0, %s31
    %s18 = sphi 0, %s27
    %s19 = sphi 0, %s16
    %s20 = sphi 0, %s17
    %s21 = sphi 0, %s18
    %s22 = sphi 0, %s19
    %s23 = sphi 0, %s20
    %s24 = sphi 0, %s21
    %s42 = sphi 0, %s44
    %s45 = sphi 0, %s42
    %s46 = sphi 0, %s45
    %s62 = sphi 0, %s46
    %s72 = sphi 0, %s74
    %s75 = sphi 0, %s72
    %s76 = sphi 0, %s75
    %s92 = sphi 0, %s76
    %s102 = sphi 0, %s104
    %s105 = sphi 0, %s102
    %s106 = sphi 0, %s105
    %s122 = sphi 0, %s106
    %s130 = sphi 0, %s132
    %s133 = sphi 0, %s130
    %s134 = sphi 0, %s133
    %s150 = sphi 0, %s134
  $region4: #{balanced_affinities_loss.1} parent=0 // loop_header_branch
    %12 = sbr.rel (%p10) target = $region8
  $region5: #{balanced_affinities_loss.1} parent=0 // loop_body
    %s14 = ssub.s32 %s9, 1
    %s15 = ssub.s32 %s9, 2
    %s25 = sadd.s32 1, %s18
    %p26 = scmp.ge.s32.totalorder %s25, 1
    %s27 = scalar_select %p26, 0, %s25
    %s28 = sadd.s32 1, %s17
    %s29 = scalar_select %p26, %s28, %s17
    %p30 = scmp.ge.s32.totalorder %s29, 1
    %s31 = scalar_select %p30, 0, %s29
    %s32 = sadd.s32 1, %s16
    %s33 = scalar_select %p30, %s32, %s16
    %p34 = scmp.ge.s32.totalorder %s33, 2
    %s35 = scalar_select %p34, 0, %s33
    %s36 = sadd.s32 %s17, %s18
    %s37 = sadd.s32 %s31, %s27
    %s38 = ssub.s32 %s16, %s35
    %s39 = ssub.s32 %s36, %s37
    %s40 = sor.u32 %s38, %s39
    %p41 = scmp.eq.s32.totalorder %s40, 0
    %s43 = sadd.s32 %s42, 1
    %s44 = scalar_select %p41, %s42, %s43
    %p47 = pneg %p41
    %p48 = scmp.eq.s32.totalorder %s9, 1
    %p49 = por %p47, %p48
    %p50 = scmp.ne.s32.totalorder %s42, %s45
    %p51 = scmp.eq.s32.totalorder %s9, 0
    %p52 = por %p50, %p51
    %p53 = scmp.ne.s32.totalorder %s42, %s45
    %p54 = scmp.eq.s32.totalorder %s14, 1
    %p55 = por %p53, %p54
    %p56 = scmp.ne.s32.totalorder %s45, %s46
    %p57 = scmp.eq.s32.totalorder %s14, 0
    %p58 = por %p56, %p57
    %p59 = scmp.ne.s32.totalorder %s45, %s46
    %p60 = scmp.eq.s32.totalorder %s15, 1
    %p61 = por %p59, %p60
    %p63 = scmp.ne.s32.totalorder %s46, %s62
    %p64 = scmp.eq.s32.totalorder %s15, 0
    %p65 = por %p63, %p64
    %s66 = sadd.s32 %s17, %s18
    %s67 = sadd.s32 %s31, %s27
    %s68 = ssub.s32 %s16, %s35
    %s69 = ssub.s32 %s66, %s67
    %s70 = sor.u32 %s68, %s69
    %p71 = scmp.eq.s32.totalorder %s70, 0
    %s73 = sadd.s32 %s72, 1
    %s74 = scalar_select %p71, %s72, %s73
    %p77 = pneg %p71
    %p78 = scmp.eq.s32.totalorder %s9, 1
    %p79 = por %p77, %p78
    %p80 = scmp.ne.s32.totalorder %s72, %s75
    %p81 = scmp.eq.s32.totalorder %s9, 0
    %p82 = por %p80, %p81
    %p83 = scmp.ne.s32.totalorder %s72, %s75
    %p84 = scmp.eq.s32.totalorder %s14, 1
    %p85 = por %p83, %p84
    %p86 = scmp.ne.s32.totalorder %s75, %s76
    %p87 = scmp.eq.s32.totalorder %s14, 0
    %p88 = por %p86, %p87
    %p89 = scmp.ne.s32.totalorder %s75, %s76
    %p90 = scmp.eq.s32.totalorder %s15, 1
    %p91 = por %p89, %p90
    %p93 = scmp.ne.s32.totalorder %s76, %s92
    %p94 = scmp.eq.s32.totalorder %s15, 0
    %p95 = por %p93, %p94
    %s96 = sadd.s32 %s17, %s18
    %s97 = sadd.s32 %s31, %s27
    %s98 = ssub.s32 %s16, %s35
    %s99 = ssub.s32 %s96, %s97
    %s100 = sor.u32 %s98, %s99
    %p101 = scmp.eq.s32.totalorder %s100, 0
    %s103 = sadd.s32 %s102, 1
    %s104 = scalar_select %p101, %s102, %s103
    %p107 = pneg %p101
    %p108 = scmp.eq.s32.totalorder %s9, 1
    %p109 = por %p107, %p108
    %p110 = scmp.ne.s32.totalorder %s102, %s105
    %p111 = scmp.eq.s32.totalorder %s9, 0
    %p112 = por %p110, %p111
    %p113 = scmp.ne.s32.totalorder %s102, %s105
    %p114 = scmp.eq.s32.totalorder %s14, 1
    %p115 = por %p113, %p114
    %p116 = scmp.ne.s32.totalorder %s105, %s106
    %p117 = scmp.eq.s32.totalorder %s14, 0
    %p118 = por %p116, %p117
    %p119 = scmp.ne.s32.totalorder %s105, %s106
    %p120 = scmp.eq.s32.totalorder %s15, 1
    %p121 = por %p119, %p120
    %p123 = scmp.ne.s32.totalorder %s106, %s122
    %p124 = scmp.eq.s32.totalorder %s15, 0
    %p125 = por %p123, %p124
    %s126 = ssub.s32 %s16, %s35
    %s127 = ssub.s32 %s17, %s31
    %s128 = sor.u32 %s126, %s127
    %p129 = scmp.eq.s32.totalorder %s128, 0
    %s131 = sadd.s32 %s130, 1
    %s132 = scalar_select %p129, %s130, %s131
    %p135 = pneg %p129
    %p136 = scmp.eq.s32.totalorder %s9, 1
    %p137 = por %p135, %p136
    %p138 = scmp.ne.s32.totalorder %s130, %s133
    %p139 = scmp.eq.s32.totalorder %s9, 0
    %p140 = por %p138, %p139
    %p141 = scmp.ne.s32.totalorder %s130, %s133
    %p142 = scmp.eq.s32.totalorder %s14, 1
    %p143 = por %p141, %p142
    %p144 = scmp.ne.s32.totalorder %s133, %s134
    %p145 = scmp.eq.s32.totalorder %s14, 0
    %p146 = por %p144, %p145
    %p147 = scmp.ne.s32.totalorder %s133, %s134
    %p148 = scmp.eq.s32.totalorder %s15, 1
    %p149 = por %p147, %p148
    %p151 = scmp.ne.s32.totalorder %s134, %s150
    %p152 = scmp.eq.s32.totalorder %s15, 0
    %p153 = por %p151, %p152
    %p154 = scmp.le.s32.totalorder 1, %s9
    %p155 = scmp.lt.s32.totalorder %s9, 3
    %p156 = pnand %p154, %p155
    %p157 = pneg %p156
    // Predicated region
    $region9: #{balanced_affinities_loss.1} parent=5 // pred_check
      _
    $region10: #{balanced_affinities_loss.1} parent=5 // pred_check_branch
      %159 = sbr.rel (%p156) target = $region12
    $region11: #{balanced_affinities_loss.1} parent=5 // pred_region
      %s160 = ssub.s32 %s9, 1
    $region12: #{balanced_affinities_loss.1} parent=5 // pred_fallthru
      _
    %p161 = scmp.lt.s32.totalorder %s9, 2
    // Predicated region
    $region13: #{balanced_affinities_loss.1} parent=5 // pred_check
      %p162 = pneg %p161
    $region14: #{balanced_affinities_loss.1} parent=5 // pred_check_branch
      %164 = sbr.rel (%p162) target = $region16
    $region15: #{balanced_affinities_loss.1} parent=5 // pred_region
      // Predicated region
      $region17: #{balanced_affinities_loss.1} parent=15 // pred_check
        %p165 = pneg %p52
      $region18: #{balanced_affinities_loss.1} parent=15 // pred_check_branch
        %167 = sbr.rel (%p165) target = $region20
      $region19: #{balanced_affinities_loss.1} parent=15 // pred_region
        %s168 = sadd.s32 %s17, %s18
        %s169 = smul.u32 4, %s168
        %p170 = scmp.lt.s32.totalorder %s16, 1
        %s171 = scalar_select %p170, %s16, 1
        %p172 = scmp.lt.s32.totalorder %s169, 3
        %s173 = scalar_select %p172, %s169, 3
        %s174 = smul.addr %s171, 8
        %s175 = sadd.s32 %s173, %s174
        %s176 = smul.addr %s175, 8
        %s177 = scalar_lea.vmem %s0, %s176
        %s178 = sadd.s32 %s17, %s18
        %s179 = smul.u32 4, %s178
      $region20: #{balanced_affinities_loss.1} parent=15 // pred_fallthru
        _
      // Predicated region
      $region21: #{balanced_affinities_loss.1} parent=15 // pred_check
        %p180 = pneg %p82
      $region22: #{balanced_affinities_loss.1} parent=15 // pred_check_branch
        %182 = sbr.rel (%p180) target = $region24
      $region23: #{balanced_affinities_loss.1} parent=15 // pred_region
        %s183 = sadd.s32 %s17, %s18
        %s184 = smul.u32 4, %s183
        %p185 = scmp.lt.s32.totalorder %s16, 1
        %s186 = scalar_select %p185, %s16, 1
        %p187 = scmp.lt.s32.totalorder %s184, 3
        %s188 = scalar_select %p187, %s184, 3
        %s189 = smul.addr %s186, 8
        %s190 = sadd.s32 %s188, %s189
        %s191 = smul.addr %s190, 8
        %s192 = scalar_lea.vmem %s1, %s191
        %s193 = sadd.s32 %s17, %s18
        %s194 = smul.u32 4, %s193
      $region24: #{balanced_affinities_loss.1} parent=15 // pred_fallthru
        _
      // Predicated region
      $region25: #{balanced_affinities_loss.1} parent=15 // pred_check
        %p195 = pneg %p112
      $region26: #{balanced_affinities_loss.1} parent=15 // pred_check_branch
        %197 = sbr.rel (%p195) target = $region28
      $region27: #{balanced_affinities_loss.1} parent=15 // pred_region
        %s198 = sadd.s32 %s17, %s18
        %s199 = smul.u32 4, %s198
        %p200 = scmp.lt.s32.totalorder %s16, 1
        %s201 = scalar_select %p200, %s16, 1
        %p202 = scmp.lt.s32.totalorder %s199, 3
        %s203 = scalar_select %p202, %s199, 3
        %s204 = smul.addr %s201, 8
        %s205 = sadd.s32 %s203, %s204
        %s206 = smul.addr %s205, 2
        %s207 = scalar_lea.vmem %s2, %s206
        %s208 = sadd.s32 %s17, %s18
        %s209 = smul.u32 4, %s208
      $region28: #{balanced_affinities_loss.1} parent=15 // pred_fallthru
        _
    $region16: #{balanced_affinities_loss.1} parent=5 // pred_fallthru
      _
    %p210 = scmp.le.s32.totalorder 1, %s9
    %p211 = scmp.lt.s32.totalorder %s9, 3
    %p212 = pnand %p210, %p211
    %p213 = pneg %p212
    // Predicated region
    $region29: #{balanced_affinities_loss.1} parent=5 // pred_check
      _
    $region30: #{balanced_affinities_loss.1} parent=5 // pred_check_branch
      %215 = sbr.rel (%p212) target = $region32
    $region31: #{balanced_affinities_loss.1} parent=5 // pred_region
      %s216 = ssub.s32 %s9, 1
      %s217 = sadd.s32 %s20, %s21
      %s218 = smul.u32 4, %s217
      %p219 = scmp.lt.s32.totalorder %s19, 1
      %s220 = scalar_select %p219, %s19, 1
      %p221 = scmp.lt.s32.totalorder %s218, 3
      %s222 = scalar_select %p221, %s218, 3
      %s223 = smul.addr %s220, 8
      %s224 = sadd.s32 %s222, %s223
      %s225 = smul.addr %s224, 8
      %s226 = scalar_lea.vmem %s0, %s225
      %p227 = pneg %p58
      %p228 = pneg %p55
      %s229 = sadd.s32 %s20, %s21
      %s230 = smul.u32 4, %s229
      %p231 = scmp.lt.s32.totalorder %s19, 1
      %s232 = scalar_select %p231, %s19, 1
      %p233 = scmp.lt.s32.totalorder %s230, 3
      %s234 = scalar_select %p233, %s230, 3
      %s235 = smul.addr %s232, 8
      %s236 = sadd.s32 %s234, %s235
      %s237 = smul.addr %s236, 8
      %s238 = scalar_lea.vmem %s1, %s237
      %p239 = pneg %p88
      %p240 = pneg %p85
      %s241 = sadd.s32 %s20, %s21
      %s242 = smul.u32 4, %s241
      %p243 = scmp.lt.s32.totalorder %s19, 1
      %s244 = scalar_select %p243, %s19, 1
      %p245 = scmp.lt.s32.totalorder %s242, 3
      %s246 = scalar_select %p245, %s242, 3
      %s247 = smul.addr %s244, 8
      %s248 = sadd.s32 %s246, %s247
      %s249 = smul.addr %s248, 2
      %s250 = scalar_lea.vmem %s2, %s249
      %p251 = pneg %p118
      %p252 = pneg %p115
      %p253 = pneg %p146
      %p254 = pneg %p143
      %p255 = scmp.lt.s32.totalorder %s19, 1
      %s256 = scalar_select %p255, %s19, 1
      %p257 = scmp.lt.s32.totalorder %s20, 0
      %s258 = scalar_select %p257, %s20, 0
      %s259 = smul.addr %s258, 2
      %s260 = smul.addr %s256, 2
      %s261 = sadd.s32 %s259, %s260
      %s262 = smul.addr %s261, 8
      %s263 = scalar_lea.vmem %s3, %s262
      %s264 = sadd.s32 %s20, %s21
      %s265 = smul.u32 4, %s264
      %p266 = scmp.lt.s32.totalorder %s19, 1
      %s267 = scalar_select %p266, %s19, 1
      %p268 = scmp.lt.s32.totalorder %s265, 3
      %s269 = scalar_select %p268, %s265, 3
      %s270 = smul.addr %s267, 8
      %s271 = sadd.s32 %s269, %s270
      %s272 = smul.addr %s271, 8
      %s273 = scalar_lea.vmem %s0, %s272
      %s274 = sadd.s32 %s20, %s21
      %s275 = smul.u32 4, %s274
      %s276 = sadd.s32 %s20, %s21
      %s277 = smul.u32 4, %s276
      %p278 = scmp.lt.s32.totalorder %s19, 1
      %s279 = scalar_select %p278, %s19, 1
      %p280 = scmp.lt.s32.totalorder %s277, 3
      %s281 = scalar_select %p280, %s277, 3
      %s282 = smul.addr %s279, 8
      %s283 = sadd.s32 %s281, %s282
      %s284 = smul.addr %s283, 8
      %s285 = scalar_lea.vmem %s1, %s284
      %s286 = sadd.s32 %s20, %s21
      %s287 = smul.u32 4, %s286
      %s288 = sadd.s32 %s20, %s21
      %s289 = smul.u32 4, %s288
      %p290 = scmp.lt.s32.totalorder %s19, 1
      %s291 = scalar_select %p290, %s19, 1
      %p292 = scmp.lt.s32.totalorder %s289, 3
      %s293 = scalar_select %p292, %s289, 3
      %s294 = smul.addr %s291, 8
      %s295 = sadd.s32 %s293, %s294
      %s296 = smul.addr %s295, 2
      %s297 = scalar_lea.vmem %s2, %s296
      %s298 = sadd.s32 %s20, %s21
      %s299 = smul.u32 4, %s298
      %p300 = scmp.lt.s32.totalorder %s19, 1
      %s301 = scalar_select %p300, %s19, 1
      %p302 = scmp.lt.s32.totalorder %s20, 0
      %s303 = scalar_select %p302, %s20, 0
      %s304 = smul.addr %s303, 2
      %s305 = smul.addr %s301, 2
      %s306 = sadd.s32 %s304, %s305
      %s307 = smul.addr %s306, 8
      %s308 = scalar_lea.vmem %s3, %s307
      %p309 = scmp.eq.s32.totalorder %s21, 0
      // Predicated region
      $region33: #{balanced_affinities_loss.1} parent=31 // pred_check
        %p310 = pneg %p309
      $region34: #{balanced_affinities_loss.1} parent=31 // pred_check_branch
        %312 = sbr.rel (%p310) target = $region36
      $region35: #{balanced_affinities_loss.1} parent=31 // pred_region
        %vm313 = vcmask 39936
        %314 = vst.msk [vmem:[%s308] sm:$0xff] %vm313, 0.0
        %vm315 = vcmask 36864
        %316 = vst.msk [vmem:[%s308 + $0x8] sm:$0x1f] %vm315, 0.0
      $region36: #{balanced_affinities_loss.1} parent=31 // pred_fallthru
        _
      %v317 = vld [vmem:[%s273] sm:$0xff]
      %v318 = vld [vmem:[%s273 + $0x8] sm:$0xff]
      %v319 = vld [vmem:[%s273 + $0x10] sm:$0xff]
      %v320 = vld [vmem:[%s273 + $0x18] sm:$0xff]
      %v321 = vld [vmem:[%s273 + $0x20] sm:$0x1f]
      %v322 = vld [vmem:[%s273 + $0x28] sm:$0x1f]
      %v323 = vld [vmem:[%s273 + $0x30] sm:$0x1f]
      %v324 = vld [vmem:[%s273 + $0x38] sm:$0x1f]
      %v325 = vld [vmem:[%s285] sm:$0xff]
      %v326 = vld [vmem:[%s285 + $0x8] sm:$0xff]
      %v327 = vld [vmem:[%s285 + $0x10] sm:$0xff]
      %v328 = vld [vmem:[%s285 + $0x18] sm:$0xff]
      %v329 = vld [vmem:[%s285 + $0x20] sm:$0x1f]
      %v330 = vld [vmem:[%s285 + $0x28] sm:$0x1f]
      %v331 = vld [vmem:[%s285 + $0x30] sm:$0x1f]
      %v332 = vld [vmem:[%s285 + $0x38] sm:$0x1f]
      %v333 = vld [vmem:[%s297] sm:$0xff]
      %v334 = vld [vmem:[%s297 + $0x8] sm:$0xff]
      %v335 = vunpack.c.0.s8 %v333
      %v336 = vunpack.c.1.s8 %v333
      %v337 = vunpack.c.2.s8 %v333
      %v338 = vunpack.c.3.s8 %v333
      %v339 = vunpack.c.0.s8 %v334
      %v340 = vunpack.c.1.s8 %v334
      %v341 = vunpack.c.2.s8 %v334
      %v342 = vunpack.c.3.s8 %v334
      %v343 = vcvt.s32.f32 %v335
      %v344 = vcvt.s32.f32 %v336
      %v345 = vcvt.s32.f32 %v337
      %v346 = vcvt.s32.f32 %v338
      %v347 = vcvt.s32.f32 %v339
      %v348 = vcvt.s32.f32 %v340
      %v349 = vcvt.s32.f32 %v341
      %v350 = vcvt.s32.f32 %v342
      %vm351 = vcmp.gt.f32.partialorder %v325, 0.0
      %vm352 = vcmp.gt.f32.partialorder %v326, 0.0
      %vm353 = vcmp.gt.f32.partialorder %v327, 0.0
      %vm354 = vcmp.gt.f32.partialorder %v328, 0.0
      %vm355 = vcmp.gt.f32.partialorder %v329, 0.0
      %vm356 = vcmp.gt.f32.partialorder %v330, 0.0
      %vm357 = vcmp.gt.f32.partialorder %v331, 0.0
      %vm358 = vcmp.gt.f32.partialorder %v332, 0.0
      %v359 = vsel %vm351, 1, 0
      %v360 = vsel %vm352, 1, 0
      %v361 = vsel %vm353, 1, 0
      %v362 = vsel %vm354, 1, 0
      %v363 = vsel %vm355, 1, 0
      %v364 = vsel %vm356, 1, 0
      %v365 = vsel %vm357, 1, 0
      %v366 = vsel %vm358, 1, 0
      %v367 = vcvt.s32.f32 %v359
      %v368 = vcvt.s32.f32 %v360
      %v369 = vcvt.s32.f32 %v361
      %v370 = vcvt.s32.f32 %v362
      %v371 = vcvt.s32.f32 %v363
      %v372 = vcvt.s32.f32 %v364
      %v373 = vcvt.s32.f32 %v365
      %v374 = vcvt.s32.f32 %v366
      %v375 = vmul.f32 %v343, %v367
      %v376 = vmul.f32 %v344, %v368
      %v377 = vmul.f32 %v345, %v369
      %v378 = vmul.f32 %v346, %v370
      %v379 = vmul.f32 %v347, %v371
      %v380 = vmul.f32 %v348, %v372
      %v381 = vmul.f32 %v349, %v373
      %v382 = vmul.f32 %v350, %v374
      %v383 = vsub.f32 %v317, %v325
      %v384 = vsub.f32 %v318, %v326
      %v385 = vsub.f32 %v319, %v327
      %v386 = vsub.f32 %v320, %v328
      %v387 = vsub.f32 %v321, %v329
      %v388 = vsub.f32 %v322, %v330
      %v389 = vsub.f32 %v323, %v331
      %v390 = vsub.f32 %v324, %v332
      %v391 = vmul.f32 %v383, %v383
      %v392 = vmul.f32 %v384, %v384
      %v393 = vmul.f32 %v385, %v385
      %v394 = vmul.f32 %v386, %v386
      %v395 = vmul.f32 %v387, %v387
      %v396 = vmul.f32 %v388, %v388
      %v397 = vmul.f32 %v389, %v389
      %v398 = vmul.f32 %v390, %v390
      %v399 = vmax.f32 %v317, 0.0
      %v400 = vmax.f32 %v318, 0.0
      %v401 = vmax.f32 %v319, 0.0
      %v402 = vmax.f32 %v320, 0.0
      %v403 = vmul.f32 %v317, %v325
      %v404 = vmul.f32 %v318, %v326
      %v405 = vmul.f32 %v319, %v327
      %v406 = vmul.f32 %v320, %v328
      %v407 = vsub.f32 %v399, %v403
      %v408 = vsub.f32 %v400, %v404
      %v409 = vsub.f32 %v401, %v405
      %v410 = vsub.f32 %v402, %v406
      %v411 = vand.u32 2147483647, %v317
      %v412 = vand.u32 2147483647, %v318
      %v413 = vand.u32 2147483647, %v319
      %v414 = vand.u32 2147483647, %v320
      %v415 = vsub.f32 0.0, %v411
      %v416 = vsub.f32 0.0, %v412
      %v417 = vsub.f32 0.0, %v413
      %v418 = vsub.f32 0.0, %v414
      %v419 = vmul.f32 %v415, 1.442695
      %v420 = vpow.pop %v419
      %v421 = vmul.f32 %v416, 1.442695
      %v422 = vpow.pop %v421
      %v423 = vmul.f32 %v417, 1.442695
      %v424 = vpow.pop %v423
      %v425 = vmul.f32 %v418, 1.442695
      %v426 = vpow.pop %v425
      %v427 = vadd.f32 %v420, 1.0
      %v428 = vadd.f32 %v422, 1.0
      %v429 = vadd.f32 %v424, 1.0
      %v430 = vadd.f32 %v426, 1.0
      %v431 = vlog2.pop %v427
      %v432 = vmul.f32 %v431, 0.6931472
      %v433 = vlog2.pop %v428
      %v434 = vmul.f32 %v433, 0.6931472
      %v435 = vlog2.pop %v429
      %v436 = vmul.f32 %v435, 0.6931472
      %v437 = vlog2.pop %v430
      %v438 = vmul.f32 %v437, 0.6931472
      %v439 = vadd.f32 %v407, %v432
      %v440 = vadd.f32 %v408, %v434
      %v441 = vadd.f32 %v409, %v436
      %v442 = vadd.f32 %v410, %v438
      %v443 = vlaneseq
      %v444 = vshrl.u32 %v443, 7
      %vm445 = vcmp.lt.s32.totalorder %v444, 3
      %v446 = vsel %vm445, 1, 0
      %vm447 = vcmp.eq.s32.totalorder %v446, 1
      %v448 = vsel %vm447, %v439, %v391
      %v449 = vsel %vm447, %v440, %v392
      %v450 = vsel %vm447, %v441, %v393
      %v451 = vsel %vm447, %v442, %v394
      %v452 = vld [vmem:[%s308] sm:$0xff]
      %v453 = vld [vmem:[%s308 + $0x8] sm:$0x1f]
      %v454 = vadd.f32 %v343, %v344
      %v455 = vadd.f32 %v454, %v345
      %v456 = vadd.f32 %v455, %v346
      %457 = vadd.xlane.f32.xlu0 %v456
      %v458 = vpop.xlane.xlu0 %457
      %vm459 = vcmask 1044480
      %v460 = vsel %vm459, %v347, 0.0
      %v461 = vsel %vm459, %v348, 0.0
      %v462 = vadd.f32 %v460, %v461
      %v463 = vsel %vm459, %v349, 0.0
      %v464 = vadd.f32 %v462, %v463
      %v465 = vsel %vm459, %v350, 0.0
      %v466 = vadd.f32 %v464, %v465
      %467 = vadd.xlane.f32.xlu0 %v466
      %v468 = vpop.xlane.xlu0 %467
      %v469 = vadd.f32 %v452, %v458
      %v470 = vadd.f32 %v453, %v468
      %vm471 = vcmask 7168
      %472 = vst.msk [vmem:[%s308] sm:$0xff] %vm471, %v469
      %vm473 = vcmask 4096
      %474 = vst.msk [vmem:[%s308 + $0x8] sm:$0x1f] %vm473, %v470
      %v475 = vld [vmem:[%s308] sm:$0xff]
      %v476 = vld [vmem:[%s308 + $0x8] sm:$0x1f]
      %v477 = vadd.f32 %v375, %v376
      %v478 = vadd.f32 %v477, %v377
      %v479 = vadd.f32 %v478, %v378
      %480 = vadd.xlane.f32.xlu0 %v479
      %v481 = vpop.xlane.xlu0 %480
      %v482 = vsel %vm459, %v379, 0.0
      %v483 = vsel %vm459, %v380, 0.0
      %v484 = vadd.f32 %v482, %v483
      %v485 = vsel %vm459, %v381, 0.0
      %v486 = vadd.f32 %v484, %v485
      %v487 = vsel %vm459, %v382, 0.0
      %v488 = vadd.f32 %v486, %v487
      %489 = vadd.xlane.f32.xlu0 %v488
      %v490 = vpop.xlane.xlu0 %489
      %v491 = vadd.f32 %v475, %v481
      %v492 = vadd.f32 %v476, %v490
      %vm493 = vcmask 15368
      %494 = vst.msk [vmem:[%s308] sm:$0xff] %vm493, %v491
      %vm495 = vcmask 12296
      %496 = vst.msk [vmem:[%s308 + $0x8] sm:$0x1f] %vm495, %v492
      %v497 = vld [vmem:[%s308] sm:$0xff]
      %v498 = vadd.f32 %v448, %v449
      %v499 = vadd.f32 %v498, %v450
      %v500 = vadd.f32 %v499, %v451
      %501 = vadd.xlane.f32.xlu0 %v500
      %v502 = vpop.xlane.xlu0 %501
      %v503 = vadd.f32 %v497, %v502
      %vm504 = vcmask 23568
      %505 = vst.msk [vmem:[%s308] sm:$0xff] %vm504, %v503
      %v506 = vld [vmem:[%s308] sm:$0xff]
      %v507 = vmul.f32 %v448, %v343
      %v508 = vmul.f32 %v449, %v344
      %v509 = vmul.f32 %v450, %v345
      %v510 = vmul.f32 %v451, %v346
      %v511 = vadd.f32 %v507, %v508
      %v512 = vadd.f32 %v511, %v509
      %v513 = vadd.f32 %v512, %v510
      %514 = vadd.xlane.f32.xlu0 %v513
      %v515 = vpop.xlane.xlu0 %514
      %v516 = vadd.f32 %v506, %v515
      %vm517 = vcmask 31768
      %518 = vst.msk [vmem:[%s308] sm:$0xff] %vm517, %v516
      %v519 = vld [vmem:[%s308] sm:$0xff]
      %v520 = vmul.f32 %v448, %v375
      %v521 = vmul.f32 %v449, %v376
      %v522 = vmul.f32 %v450, %v377
      %v523 = vmul.f32 %v451, %v378
      %v524 = vadd.f32 %v520, %v521
      %v525 = vadd.f32 %v524, %v522
      %v526 = vadd.f32 %v525, %v523
      %527 = vadd.xlane.f32.xlu0 %v526
      %v528 = vpop.xlane.xlu0 %527
      %v529 = vadd.f32 %v519, %v528
      %vm530 = vcmask 39968
      %531 = vst.msk [vmem:[%s308] sm:$0xff] %vm530, %v529
      %v532 = vld [vmem:[%s308 + $0x8] sm:$0x1f]
      %v533 = vsel %vm459, %v395, 0.0
      %v534 = vsel %vm459, %v396, 0.0
      %v535 = vadd.f32 %v533, %v534
      %v536 = vsel %vm459, %v397, 0.0
      %v537 = vadd.f32 %v535, %v536
      %v538 = vsel %vm459, %v398, 0.0
      %v539 = vadd.f32 %v537, %v538
      %540 = vadd.xlane.f32.xlu0 %v539
      %v541 = vpop.xlane.xlu0 %540
      %v542 = vadd.f32 %v532, %v541
      %vm543 = vcmask 20496
      %544 = vst.msk [vmem:[%s308 + $0x8] sm:$0x1f] %vm543, %v542
      %v545 = vld [vmem:[%s308 + $0x8] sm:$0x1f]
      %v546 = vmul.f32 %v395, %v347
      %v547 = vmul.f32 %v396, %v348
      %v548 = vmul.f32 %v397, %v349
      %v549 = vmul.f32 %v398, %v350
      %v550 = vsel %vm459, %v546, 0.0
      %v551 = vsel %vm459, %v547, 0.0
      %v552 = vadd.f32 %v550, %v551
      %v553 = vsel %vm459, %v548, 0.0
      %v554 = vadd.f32 %v552, %v553
      %v555 = vsel %vm459, %v549, 0.0
      %v556 = vadd.f32 %v554, %v555
      %557 = vadd.xlane.f32.xlu0 %v556
      %v558 = vpop.xlane.xlu0 %557
      %v559 = vadd.f32 %v545, %v558
      %vm560 = vcmask 28696
      %561 = vst.msk [vmem:[%s308 + $0x8] sm:$0x1f] %vm560, %v559
      %v562 = vld [vmem:[%s308 + $0x8] sm:$0x1f]
      %v563 = vmul.f32 %v395, %v379
      %v564 = vmul.f32 %v396, %v380
      %v565 = vmul.f32 %v397, %v381
      %v566 = vmul.f32 %v398, %v382
      %v567 = vsel %vm459, %v563, 0.0
      %v568 = vsel %vm459, %v564, 0.0
      %v569 = vadd.f32 %v567, %v568
      %v570 = vsel %vm459, %v565, 0.0
      %v571 = vadd.f32 %v569, %v570
      %v572 = vsel %vm459, %v566, 0.0
      %v573 = vadd.f32 %v571, %v572
      %574 = vadd.xlane.f32.xlu0 %v573
      %v575 = vpop.xlane.xlu0 %574
      %v576 = vadd.f32 %v562, %v575
      %vm577 = vcmask 36896
      %578 = vst.msk [vmem:[%s308 + $0x8] sm:$0x1f] %vm577, %v576
      %p579 = scmp.lt.s32.totalorder %s19, 1
      %s580 = scalar_select %p579, %s19, 1
      %p581 = scmp.lt.s32.totalorder %s20, 0
      %s582 = scalar_select %p581, %s20, 0
      %s583 = smul.addr %s582, 2
      %s584 = smul.addr %s580, 2
      %s585 = sadd.s32 %s583, %s584
      %s586 = smul.addr %s585, 8
      %s587 = scalar_lea.vmem %s3, %s586
      // Predicated region
      $region37: #{balanced_affinities_loss.1} parent=31 // pred_check
        %p588 = pneg %p143
      $region38: #{balanced_affinities_loss.1} parent=31 // pred_check_branch
        %590 = sbr.rel (%p588) target = $region40
      $region39: #{balanced_affinities_loss.1} parent=31 // pred_region
        _
      $region40: #{balanced_affinities_loss.1} parent=31 // pred_fallthru
        _
    $region32: #{balanced_affinities_loss.1} parent=5 // pred_fallthru
      _
    %p591 = scmp.le.s32.totalorder 2, %s9
    // Predicated region
    $region41: #{balanced_affinities_loss.1} parent=5 // pred_check
      %p592 = pneg %p591
    $region42: #{balanced_affinities_loss.1} parent=5 // pred_check_branch
      %594 = sbr.rel (%p592) target = $region44
    $region43: #{balanced_affinities_loss.1} parent=5 // pred_region
      %s595 = ssub.s32 %s9, 2
      // Predicated region
      $region45: #{balanced_affinities_loss.1} parent=43 // pred_check
        %p596 = pneg %p149
      $region46: #{balanced_affinities_loss.1} parent=43 // pred_check_branch
        %598 = sbr.rel (%p596) target = $region48
      $region47: #{balanced_affinities_loss.1} parent=43 // pred_region
        %p599 = scmp.lt.s32.totalorder %s22, 1
        %s600 = scalar_select %p599, %s22, 1
        %p601 = scmp.lt.s32.totalorder %s23, 0
        %s602 = scalar_select %p601, %s23, 0
        %s603 = smul.addr %s602, 2
        %s604 = smul.addr %s600, 2
        %s605 = sadd.s32 %s603, %s604
        %s606 = smul.addr %s605, 8
        %s607 = scalar_lea.vmem %s3, %s606
      $region48: #{balanced_affinities_loss.1} parent=43 // pred_fallthru
        _
    $region44: #{balanced_affinities_loss.1} parent=5 // pred_fallthru
      _
  $region6: #{balanced_affinities_loss.1} parent=0 // loop_footer
    %s13 = sadd.s32 1, %s9
  $region7: #{balanced_affinities_loss.1} parent=0 // loop_footer_branch
    %8 = sbr.rel target = $region3
  $region8: #{balanced_affinities_loss.1} parent=0 // loop_exit
    _

</llo_original>
